<compile_context>
chip_gen: v7x
topology: tpu7x:2x2x1
jax: 0.10.0
libtpu: 0.0.40
codegen_flags: <defaults>
</compile_context>

<pallas_src>
import jax
import jax.numpy as jnp
from jax.experimental import pallas as pl
from jax.experimental.pallas import tpu as pltpu


def _cdiv(a, b):
    return -(-a // b)


def _round_up(n, m):
    return _cdiv(n, m) * m


def _policy_kernel(x_ref, w1_ref, b1_ref, w2_ref, b2_ref, wa_ref, ba_ref, out_ref):
    # f32 HBM read; free in-kernel VPU cast to bf16 for the MXU.
    x = x_ref[...].astype(jnp.bfloat16)                                 # [TB, F]
    # fc1 + ReLU (dropout = identity). bf16 MXU inputs, f32 accumulation.
    h1 = jnp.dot(x, w1_ref[...], preferred_element_type=jnp.float32) + b1_ref[...]
    h1 = jnp.maximum(h1, 0.0)                                           # [TB, H] f32
    # fc2 + ReLU (dropout = identity)
    h2 = jnp.dot(h1.astype(jnp.bfloat16), w2_ref[...],
                 preferred_element_type=jnp.float32) + b2_ref[...]
    h2 = jnp.maximum(h2, 0.0)                                           # [TB, H/2] f32
    # actor head (lane-padded to 128) + softmax over actions (dim=1).
    # Padded lanes carry bias = -1e30 and zero weights -> exp() == 0 exactly.
    logits = jnp.dot(h2.astype(jnp.bfloat16), wa_ref[...],
                     preferred_element_type=jnp.float32) + ba_ref[...]  # [TB, 128]
    m = jnp.max(logits, axis=1, keepdims=True)
    e = jnp.exp(logits - m)
    denom = jnp.sum(e, axis=1, keepdims=True)
    # Exact division keeps the simplex exact in f32; store bf16 (halves HBM write).
    out_ref[...] = (e / denom).astype(out_ref.dtype)


def _choose_tiling(b, max_tile_rows):
    """Pick (TB, B_pad, n_tiles): TB multiple of 16, >=2 even tiles when splittable."""
    n_tiles = _cdiv(b, max_tile_rows)
    if b > 16:
        n_tiles = max(n_tiles, 2)        # keep both v7x TensorCores busy
        if n_tiles % 2:
            n_tiles += 1                 # even step count for 2-way sharding
    tb = _round_up(_cdiv(b, n_tiles), 16)
    b_pad = _round_up(b, tb)
    return tb, b_pad, _cdiv(b_pad, tb)


def prepare_params(params, *, lane=128):
    """One-time prep, OFF the per-forward path: cast MXU weights to bf16, keep biases
    f32, and lane-pad the actor head to 128 with -1e30 padded biases."""
    wa, ba = params["wa"], params["ba"]
    a = wa.shape[1]
    a_pad = _round_up(a, lane)
    return {
        "w1": params["w1"].astype(jnp.bfloat16),
        "b1": params["b1"].astype(jnp.float32),
        "w2": params["w2"].astype(jnp.bfloat16),
        "b2": params["b2"].astype(jnp.float32),
        "wa": jnp.pad(wa, ((0, 0), (0, a_pad - a))).astype(jnp.bfloat16),
        "ba": jnp.concatenate(
            [ba.astype(jnp.float32),
             jnp.full((1, a_pad - a), -1e30, dtype=jnp.float32)], axis=1),
        "num_actions": a,
    }


def policy_network_forward(x, prep, *, max_tile_rows=4096):
    """x: [B, F] float32. prep: output of prepare_params (weights as [in, out])."""
    w1, b1, w2, b2, wa, ba = (prep["w1"], prep["b1"], prep["w2"],
                              prep["b2"], prep["wa"], prep["ba"])
    A = prep["num_actions"]
    B, F = x.shape
    H = w1.shape[1]
    H2 = w2.shape[1]
    A_pad = wa.shape[1]

    TB, B_pad, n_tiles = _choose_tiling(B, max_tile_rows)
    if B_pad != B:
        x = jnp.pad(x, ((0, B_pad - B), (0, 0)))
    x = x.astype(jnp.float32)  # kernel reads f32; bf16 cast happens on-chip

    weight_bytes = ((w1.size + w2.size + wa.size) * 2
                    + (b1.size + b2.size + ba.size) * 4)
    cost = pl.CostEstimate(
        flops=2 * B_pad * (F * H + H * H2 + H2 * A_pad),
        transcendentals=B_pad * A_pad,
        bytes_accessed=B_pad * F * 4 + weight_bytes + B_pad * A_pad * 2,
    )

    # Derived VMEM footprint: double-buffered x/out tiles + resident weights
    # (double-buffered by default) + f32 in-kernel intermediates. Leave 2x headroom,
    # clamp well below v7x's 64 MiB physical.
    vmem_bytes = (2 * TB * F * 4 + 2 * TB * A_pad * 2
                  + 2 * weight_bytes
                  + TB * (H + H2 + 2 * A_pad) * 4)
    vmem_limit = int(min(max(2 * vmem_bytes, 16 * 1024 * 1024), 48 * 1024 * 1024))

    # Weights/biases: full block, same block index every grid step -> VMEM-resident.
    # (pipeline_mode=pl.Buffered(1) would halve their reservation; negligible at H=32.)
    resident = lambda arr: pl.BlockSpec(arr.shape, lambda i: (0, 0))

    out = pl.pallas_call(
        _policy_kernel,
        out_shape=jax.ShapeDtypeStruct((B_pad, A_pad), jnp.bfloat16),
        grid=(n_tiles,),
        in_specs=[
            pl.BlockSpec((TB, F), lambda i: (i, 0)),   # x: tiled over batch
            resident(w1), resident(b1),
            resident(w2), resident(b2),
            resident(wa), resident(ba),
        ],
        out_specs=pl.BlockSpec((TB, A_pad), lambda i: (i, 0)),
        compiler_params=pltpu.CompilerParams(
            dimension_semantics=("parallel",),         # shards batch tiles on v7x
            vmem_limit_bytes=vmem_limit,
        ),
        cost_estimate=cost,
    )(x, w1, b1, w2, b2, wa, ba)

    return out[:B, :A]


def init_params(key, num_features, num_actions, hidden_size):
    """Deterministic f32 init. Weights stored as [in, out] (pre-transposed vs PyTorch)."""
    h2 = hidden_size // 2
    ks = jax.random.split(key, 8)

    def linear(kw, kb, fan_in, fan_out):
        # PyTorch nn.Linear default: U(-1/sqrt(fan_in), 1/sqrt(fan_in))
        bound = 1.0 / jnp.sqrt(jnp.float32(fan_in))
        w = jax.random.uniform(kw, (fan_in, fan_out), jnp.float32, -bound, bound)
        b = jax.random.uniform(kb, (1, fan_out), jnp.float32, -bound, bound)
        return w, b

    w1, b1 = linear(ks[0], ks[1], num_features, hidden_size)
    w2, b2 = linear(ks[2], ks[3], hidden_size, h2)
    wa, ba = linear(ks[4], ks[5], h2, num_actions)
    # critic head params exist in the module but its output is discarded in forward.
    return {"w1": w1, "b1": b1, "w2": w2, "b2": b2, "wa": wa, "ba": ba}


def _reference_forward(x, params):
    """Pure-JAX f32 reference (eval-mode dropout = identity)."""
    h1 = jnp.maximum(x @ params["w1"] + params["b1"], 0.0)
    h2 = jnp.maximum(h1 @ params["w2"] + params["b2"], 0.0)
    logits = h2 @ params["wa"] + params["ba"]
    return jax.nn.softmax(logits, axis=1)


if __name__ == "__main__":
    # Small shapes consistent with the module: batch=8, num_features=16,
    # hidden_size=32 (so fc2 out = 16), num_actions=8.
    B, F, H, A = 8, 16, 32, 8

    key = jax.random.PRNGKey(0)
    k_x, k_p = jax.random.split(key)
    x = jax.random.normal(k_x, (B, F), dtype=jnp.float32)
    params = init_params(k_p, F, A, H)
    prepared = prepare_params(params)          # one-time cast/pad, off the call path

    action_probs = jax.block_until_ready(policy_network_forward(x, prepared))
    ref = _reference_forward(x, params)

    assert action_probs.shape == (B, A)
    p32 = action_probs.astype(jnp.float32)
    # bf16 matmul inputs + bf16 output -> loose tolerances vs the f32 reference
    assert jnp.allclose(jnp.sum(p32, axis=1), 1.0, atol=5e-3)
    assert jnp.allclose(p32, ref, atol=2e-2)
    print("KERNEL_OK")
</pallas_src>

<mosaic_0001>
module attributes {stable_mosaic.version = 11 : i64} {
  func.func @_policy_kernel(%arg0: i32, %arg1: memref<16x16xf32, #tpu.memory_space<vmem>>, %arg2: memref<16x32xbf16, #tpu.memory_space<vmem>>, %arg3: memref<1x32xf32, #tpu.memory_space<vmem>>, %arg4: memref<32x16xbf16, #tpu.memory_space<vmem>>, %arg5: memref<1x16xf32, #tpu.memory_space<vmem>>, %arg6: memref<16x128xbf16, #tpu.memory_space<vmem>>, %arg7: memref<1x128xf32, #tpu.memory_space<vmem>>, %arg8: memref<16x128xbf16, #tpu.memory_space<vmem>>) attributes {dimension_semantics = [#tpu.dimension_semantics<parallel>], iteration_bounds = array<i64: 1>, scalar_prefetch = 0 : i64, scratch_operands = 0 : i64, tpu.core_type = #tpu.core_type<tc>, window_params = [{transform_indices = @transform_0, window_bounds = array<i64: 16, 16>}, {pipeline_mode = #tpu.pipeline_mode<synchronous>, transform_indices = @transform_1, window_bounds = array<i64: 16, 32>}, {pipeline_mode = #tpu.pipeline_mode<synchronous>, transform_indices = @transform_2, window_bounds = array<i64: 1, 32>}, {pipeline_mode = #tpu.pipeline_mode<synchronous>, transform_indices = @transform_3, window_bounds = array<i64: 32, 16>}, {pipeline_mode = #tpu.pipeline_mode<synchronous>, transform_indices = @transform_4, window_bounds = array<i64: 1, 16>}, {pipeline_mode = #tpu.pipeline_mode<synchronous>, transform_indices = @transform_5, window_bounds = array<i64: 16, 128>}, {pipeline_mode = #tpu.pipeline_mode<synchronous>, transform_indices = @transform_6, window_bounds = array<i64: 1, 128>}, {transform_indices = @transform_7, window_bounds = array<i64: 16, 128>}]} {
    %c0 = arith.constant 0 : index
    %c0_0 = arith.constant 0 : index
    %0 = vector.load %arg1[%c0, %c0_0] : memref<16x16xf32, #tpu.memory_space<vmem>>, vector<16x16xf32>
    %1 = arith.truncf %0 : vector<16x16xf32> to vector<16x16xbf16>
    %c0_1 = arith.constant 0 : index
    %c0_2 = arith.constant 0 : index
    %2 = vector.load %arg2[%c0_1, %c0_2] : memref<16x32xbf16, #tpu.memory_space<vmem>>, vector<16x32xbf16>
    %cst = arith.constant dense<0.000000e+00> : vector<16x32xf32>
    %3 = tpu.matmul %1, %2, %cst {dimension_numbers = #tpu.dot_dimension_numbers<[1], [0], [0], [1], [0, 0, 1, 1], [], []>} : vector<16x16xbf16>, vector<16x32xbf16>, vector<16x32xf32> -> vector<16x32xf32>
    %c0_3 = arith.constant 0 : index
    %c0_4 = arith.constant 0 : index
    %4 = vector.load %arg3[%c0_3, %c0_4] : memref<1x32xf32, #tpu.memory_space<vmem>>, vector<1x32xf32>
    %5 = vector.broadcast %4 : vector<1x32xf32> to vector<16x32xf32>
    %6 = arith.addf %3, %5 : vector<16x32xf32>
    %cst_5 = arith.constant 0.000000e+00 : f32
    %7 = vector.broadcast %cst_5 : f32 to vector<16x32xf32>
    %8 = arith.maximumf %6, %7 : vector<16x32xf32>
    %9 = arith.truncf %8 : vector<16x32xf32> to vector<16x32xbf16>
    %c0_6 = arith.constant 0 : index
    %c0_7 = arith.constant 0 : index
    %10 = vector.load %arg4[%c0_6, %c0_7] : memref<32x16xbf16, #tpu.memory_space<vmem>>, vector<32x16xbf16>
    %cst_8 = arith.constant dense<0.000000e+00> : vector<16x16xf32>
    %11 = tpu.matmul %9, %10, %cst_8 {dimension_numbers = #tpu.dot_dimension_numbers<[1], [0], [0], [1], [0, 0, 1, 1], [], []>} : vector<16x32xbf16>, vector<32x16xbf16>, vector<16x16xf32> -> vector<16x16xf32>
    %c0_9 = arith.constant 0 : index
    %c0_10 = arith.constant 0 : index
    %12 = vector.load %arg5[%c0_9, %c0_10] : memref<1x16xf32, #tpu.memory_space<vmem>>, vector<1x16xf32>
    %13 = vector.broadcast %12 : vector<1x16xf32> to vector<16x16xf32>
    %14 = arith.addf %11, %13 : vector<16x16xf32>
    %cst_11 = arith.constant 0.000000e+00 : f32
    %15 = vector.broadcast %cst_11 : f32 to vector<16x16xf32>
    %16 = arith.maximumf %14, %15 : vector<16x16xf32>
    %17 = arith.truncf %16 : vector<16x16xf32> to vector<16x16xbf16>
    %c0_12 = arith.constant 0 : index
    %c0_13 = arith.constant 0 : index
    %18 = vector.load %arg6[%c0_12, %c0_13] : memref<16x128xbf16, #tpu.memory_space<vmem>>, vector<16x128xbf16>
    %cst_14 = arith.constant dense<0.000000e+00> : vector<16x128xf32>
    %19 = tpu.matmul %17, %18, %cst_14 {dimension_numbers = #tpu.dot_dimension_numbers<[1], [0], [0], [1], [0, 0, 1, 1], [], []>} : vector<16x16xbf16>, vector<16x128xbf16>, vector<16x128xf32> -> vector<16x128xf32>
    %c0_15 = arith.constant 0 : index
    %c0_16 = arith.constant 0 : index
    %20 = vector.load %arg7[%c0_15, %c0_16] : memref<1x128xf32, #tpu.memory_space<vmem>>, vector<1x128xf32>
    %21 = vector.broadcast %20 : vector<1x128xf32> to vector<16x128xf32>
    %22 = arith.addf %19, %21 : vector<16x128xf32>
    %cst_17 = arith.constant dense<0xFF800000> : vector<16xf32>
    %23 = vector.multi_reduction <maximumf>, %22, %cst_17 [1] : vector<16x128xf32> to vector<16xf32>
    %24 = vector.shape_cast %23 : vector<16xf32> to vector<16x1xf32>
    %25 = vector.broadcast %24 : vector<16x1xf32> to vector<16x128xf32>
    %26 = arith.subf %22, %25 : vector<16x128xf32>
    %27 = math.exp %26 : vector<16x128xf32>
    %cst_18 = arith.constant dense<0.000000e+00> : vector<16xf32>
    %28 = vector.multi_reduction <add>, %27, %cst_18 [1] : vector<16x128xf32> to vector<16xf32>
    %29 = vector.shape_cast %28 : vector<16xf32> to vector<16x1xf32>
    %30 = vector.broadcast %29 : vector<16x1xf32> to vector<16x128xf32>
    %31 = arith.divf %27, %30 : vector<16x128xf32>
    %32 = arith.truncf %31 : vector<16x128xf32> to vector<16x128xbf16>
    %c0_19 = arith.constant 0 : index
    %c0_20 = arith.constant 0 : index
    %33 = vector.load %arg8[%c0_19, %c0_20] : memref<16x128xbf16, #tpu.memory_space<vmem>>, vector<16x128xbf16>
    tpu.vector_store %arg8[%c0_19, %c0_20], %32 {strides = array<i32>} : memref<16x128xbf16, #tpu.memory_space<vmem>>, vector<16x128xbf16>,
    return
  }
  func.func @transform_0(%arg0: i32) -> (i32, i32) {
    %c0_i32 = arith.constant 0 : i32
    %c0_i32_0 = arith.constant 0 : i32
    return %arg0, %c0_i32 : i32, i32
  }
  func.func @transform_1(%arg0: i32) -> (i32, i32) {
    %c0_i32 = arith.constant 0 : i32
    %c0_i32_0 = arith.constant 0 : i32
    %c0_i32_1 = arith.constant 0 : i32
    return %c0_i32, %c0_i32_0 : i32, i32
  }
  func.func @transform_2(%arg0: i32) -> (i32, i32) {
    %c0_i32 = arith.constant 0 : i32
    %c0_i32_0 = arith.constant 0 : i32
    %c0_i32_1 = arith.constant 0 : i32
    return %c0_i32, %c0_i32_0 : i32, i32
  }
  func.func @transform_3(%arg0: i32) -> (i32, i32) {
    %c0_i32 = arith.constant 0 : i32
    %c0_i32_0 = arith.constant 0 : i32
    %c0_i32_1 = arith.constant 0 : i32
    return %c0_i32, %c0_i32_0 : i32, i32
  }
  func.func @transform_4(%arg0: i32) -> (i32, i32) {
    %c0_i32 = arith.constant 0 : i32
    %c0_i32_0 = arith.constant 0 : i32
    %c0_i32_1 = arith.constant 0 : i32
    return %c0_i32, %c0_i32_0 : i32, i32
  }
  func.func @transform_5(%arg0: i32) -> (i32, i32) {
    %c0_i32 = arith.constant 0 : i32
    %c0_i32_0 = arith.constant 0 : i32
    %c0_i32_1 = arith.constant 0 : i32
    return %c0_i32, %c0_i32_0 : i32, i32
  }
  func.func @transform_6(%arg0: i32) -> (i32, i32) {
    %c0_i32 = arith.constant 0 : i32
    %c0_i32_0 = arith.constant 0 : i32
    %c0_i32_1 = arith.constant 0 : i32
    return %c0_i32, %c0_i32_0 : i32, i32
  }
  func.func @transform_7(%arg0: i32) -> (i32, i32) {
    %c0_i32 = arith.constant 0 : i32
    %c0_i32_0 = arith.constant 0 : i32
    return %arg0, %c0_i32 : i32, i32
  }
}

</mosaic_0001>

<llo_original>
// kernel: tpu_custom_call.1
$region0: #{tpu_custom_call.1}
  #allocation0 [shape = 'u32[]', space=smem, size = 0x4, offset = 0x4, fixed_abs, tag = 'smem constant byte address 0x4 - core index']
  #allocation1 [shape = 'u32[144,128]{1,0:T(1,128)}', space=vmem, size = 0x12000, scoped, tag = 'internal scratch']
  %s0 = inlined_call_operand.vmem [shape: f32[16,16], index: 0, kind: input, shape index: {}]
  %s1 = inlined_call_operand.vmem [shape: bf16[16,32], index: 1, kind: input, shape index: {}]
  %s2 = inlined_call_operand.vmem [shape: f32[1,32], index: 2, kind: input, shape index: {}]
  %s3 = inlined_call_operand.vmem [shape: bf16[32,16], index: 3, kind: input, shape index: {}]
  %s4 = inlined_call_operand.vmem [shape: f32[1,16], index: 4, kind: input, shape index: {}]
  %s5 = inlined_call_operand.vmem [shape: bf16[16,128], index: 5, kind: input, shape index: {}]
  %s6 = inlined_call_operand.vmem [shape: f32[1,128], index: 6, kind: input, shape index: {}]
  %s7 = inlined_call_operand.hbm [shape: bf16[16,128], index: 7, kind: output, shape index: {}]
  %s8 = sld [smem:[#allocation0]]
  $region38: #{tpu_custom_call.1} parent=0
    _
  %s10 = ssub.s32 1, %s8
  %s11 = scalar_select 0, %s10, %s8
  $region1: #{tpu_custom_call.1} parent=0
    #allocation2 [shape = 'u8[4096]{0}', space=vmem, size = 0x1000, scoped, tag = 'output window, operand 0, single buffered']
    #allocation3 [shape = 's32[1]{0}', space=sflag, size = 0x4, scoped, tag = 'scoped memory for tpu_custom_call.1']
    %12 = vsyncpa [#allocation3], 0
    // Predicated region
    $region2: #{tpu_custom_call.1} parent=1 // pred_check
      _
    $region3: #{tpu_custom_call.1} parent=1 // pred_check_branch
      %14 = sbr.rel (0) target = $region5
    $region4: #{tpu_custom_call.1} parent=1 // pred_region
      _
    $region5: #{tpu_custom_call.1} parent=1 // pred_fallthru
      _
    // Predicated region
    $region6: #{tpu_custom_call.1} parent=1 // pred_check
      _
    $region7: #{tpu_custom_call.1} parent=1 // pred_check_branch
      %16 = sbr.rel (0) target = $region9
    $region8: #{tpu_custom_call.1} parent=1 // pred_region
      _
    $region9: #{tpu_custom_call.1} parent=1 // pred_fallthru
      _
    // Predicated region
    $region10: #{tpu_custom_call.1} parent=1 // pred_check
      _
    $region11: #{tpu_custom_call.1} parent=1 // pred_check_branch
      %18 = sbr.rel (0) target = $region13
    $region12: #{tpu_custom_call.1} parent=1 // pred_region
      _
    $region13: #{tpu_custom_call.1} parent=1 // pred_fallthru
      _
    // Predicated region
    $region14: #{tpu_custom_call.1} parent=1 // pred_check
      _
    $region15: #{tpu_custom_call.1} parent=1 // pred_check_branch
      %20 = sbr.rel (0) target = $region17
    $region16: #{tpu_custom_call.1} parent=1 // pred_region
      _
    $region17: #{tpu_custom_call.1} parent=1 // pred_fallthru
      _
    // Predicated region
    $region18: #{tpu_custom_call.1} parent=1 // pred_check
      _
    $region19: #{tpu_custom_call.1} parent=1 // pred_check_branch
      %22 = sbr.rel (0) target = $region21
    $region20: #{tpu_custom_call.1} parent=1 // pred_region
      _
    $region21: #{tpu_custom_call.1} parent=1 // pred_fallthru
      _
    // Predicated region
    $region22: #{tpu_custom_call.1} parent=1 // pred_check
      _
    $region23: #{tpu_custom_call.1} parent=1 // pred_check_branch
      %24 = sbr.rel (0) target = $region25
    $region24: #{tpu_custom_call.1} parent=1 // pred_region
      _
    $region25: #{tpu_custom_call.1} parent=1 // pred_fallthru
      _
    // Predicated region
    $region26: #{tpu_custom_call.1} parent=1 // pred_check
      _
    $region27: #{tpu_custom_call.1} parent=1 // pred_check_branch
      %26 = sbr.rel (0) target = $region29
    $region28: #{tpu_custom_call.1} parent=1 // pred_region
      _
    $region29: #{tpu_custom_call.1} parent=1 // pred_fallthru
      _
    %v28 = vld [vmem:[%s0] sm:$0xff]
    %v29 = vld [vmem:[%s0 + $0x8] sm:$0xff]
    %v30 = vpack.c.bf16 %v29, %v28
    %v31 = vld [vmem:[%s1] sm:$0xf]
    %v32 = vld [vmem:[%s1 + $0x4] sm:$0xf]
    %v33 = vld [vmem:[%s2] sm:$0x1]
    %v35 = vlaneseq
    %v36 = vshrl.u32 %v35, 7
    %v37 = vsub.s32 0, %v36
    %v38 = vrot.slane %v33, %v37
    %v42 = vunpack.c.l.b16 %v31
    %v43 = vunpack.c.l.b16 %v32
    %v44 = vpack.c.b16 %v43, %v42
    %vm46 = vcmask 130048
    %v48 = vsel %vm46, %v30, 0
    %50 = vmatprep.subr.bf16.mxu0 0
    %51 = vmatpush1.bf16.msra.mxu0 %v44
    %52 = vmatprep.subr.bf16.mxu0 0
    %53 = vmatpush1.bf16.msra.mxu0 0
    %54 = vmatprep.subr.bf16.mxu0 0
    %55 = vmatpush1.bf16.msra.mxu0 0
    %56 = vmatprep.subr.bf16.mxu0 0
    %57 = vmatpush1.bf16.msra.mxu0 0
    %58 = vmatprep.subr.bf16.mxu0 0
    %59 = vmatpush1.bf16.msra.mxu0 0
    %60 = vmatprep.subr.bf16.mxu0 0
    %61 = vmatpush1.bf16.msra.mxu0 0
    %62 = vmatprep.subr.bf16.mxu0 0
    %63 = vmatpush1.bf16.msra.mxu0 0
    %64 = vmatprep.subr.bf16.mxu0 0
    %65 = vmatpush1.bf16.msra.mxu0 0
    %66 = vmatprep.subr.bf16.mxu0 0
    %67 = vmatpush1.bf16.msra.mxu0 0
    %68 = vmatprep.subr.bf16.mxu0 0
    %69 = vmatpush1.bf16.msra.mxu0 0
    %70 = vmatprep.subr.bf16.mxu0 0
    %71 = vmatpush1.bf16.msra.mxu0 0
    %72 = vmatprep.subr.bf16.mxu0 0
    %73 = vmatpush1.bf16.msra.mxu0 0
    %74 = vmatprep.subr.bf16.mxu0 0
    %75 = vmatpush1.bf16.msra.mxu0 0
    %76 = vmatprep.subr.bf16.mxu0 0
    %77 = vmatpush1.bf16.msra.mxu0 0
    %78 = vmatprep.subr.bf16.mxu0 0
    %79 = vmatpush1.bf16.msra.mxu0 0
    %80 = vmatprep.subr.bf16.mxu0 0
    %81 = vmatpush1.bf16.msra.mxu0 0
    %82 = vmatprep.mubr.bf16.mxu0 0
    %83 = vmatmul.mubr.bf16.gmra.mrb[0].mxu0 %v48
    %v84 = vpop.f32.mrb[0].mxu0
    %v85 = vadd.f32 %v38, %v84
    %v86 = vpop.f32.mrb[0].mxu0
    %v87 = vpop.f32.mrb[0].mxu0
    %v88 = vadd.f32 %v38, %v87
    %v89 = vpop.f32.mrb[0].mxu0
    %90 = vdwg.mxu0
    %v91 = vmax.f32 %v85, 0.0
    %v92 = vmax.f32 %v88, 0.0
    %v93 = vpack.c.bf16 %v92, %v91
    %v94 = vld [vmem:[%s3] sm:$0xf]
    %v95 = vld [vmem:[%s3 + $0x4] sm:$0xf]
    %v96 = vld [vmem:[%s3 + $0x8] sm:$0xf]
    %v97 = vld [vmem:[%s3 + $0xc] sm:$0xf]
    %v98 = vld [vmem:[%s4] sm:$0x1]
    %v100 = vlaneseq
    %v101 = vshrl.u32 %v100, 7
    %v102 = vsub.s32 0, %v101
    %v103 = vrot.slane %v98, %v102
    %v109 = vunpack.c.l.b16 %v94
    %v110 = vunpack.c.l.b16 %v95
    %v111 = vunpack.c.l.b16 %v96
    %v112 = vunpack.c.l.b16 %v97
    %v113 = vpack.c.b16 %v110, %v109
    %v114 = vpack.c.b16 %v112, %v111
    %vm117 = vcmask 261120
    %v119 = vsel %vm117, %v93, 0
    %121 = vmatprep.subr.bf16.mxu0 0
    %122 = vmatpush1.bf16.msra.mxu0 %v113
    %123 = vmatprep.subr.bf16.mxu0 0
    %124 = vmatpush1.bf16.msra.mxu0 %v114
    %125 = vmatprep.subr.bf16.mxu0 0
    %126 = vmatpush1.bf16.msra.mxu0 0
    %127 = vmatprep.subr.bf16.mxu0 0
    %128 = vmatpush1.bf16.msra.mxu0 0
    %129 = vmatprep.subr.bf16.mxu0 0
    %130 = vmatpush1.bf16.msra.mxu0 0
    %131 = vmatprep.subr.bf16.mxu0 0
    %132 = vmatpush1.bf16.msra.mxu0 0
    %133 = vmatprep.subr.bf16.mxu0 0
    %134 = vmatpush1.bf16.msra.mxu0 0
    %135 = vmatprep.subr.bf16.mxu0 0
    %136 = vmatpush1.bf16.msra.mxu0 0
    %137 = vmatprep.subr.bf16.mxu0 0
    %138 = vmatpush1.bf16.msra.mxu0 0
    %139 = vmatprep.subr.bf16.mxu0 0
    %140 = vmatpush1.bf16.msra.mxu0 0
    %141 = vmatprep.subr.bf16.mxu0 0
    %142 = vmatpush1.bf16.msra.mxu0 0
    %143 = vmatprep.subr.bf16.mxu0 0
    %144 = vmatpush1.bf16.msra.mxu0 0
    %145 = vmatprep.subr.bf16.mxu0 0
    %146 = vmatpush1.bf16.msra.mxu0 0
    %147 = vmatprep.subr.bf16.mxu0 0
    %148 = vmatpush1.bf16.msra.mxu0 0
    %149 = vmatprep.subr.bf16.mxu0 0
    %150 = vmatpush1.bf16.msra.mxu0 0
    %151 = vmatprep.subr.bf16.mxu0 0
    %152 = vmatpush1.bf16.msra.mxu0 0
    %153 = vmatprep.mubr.bf16.mxu0 0
    %154 = vmatmul.mubr.bf16.gmra.mrb[0].mxu0 %v119
    %v155 = vpop.f32.mrb[0].mxu0
    %v156 = vadd.f32 %v103, %v155
    %v157 = vpop.f32.mrb[0].mxu0
    %v158 = vpop.f32.mrb[0].mxu0
    %v159 = vadd.f32 %v103, %v158
    %v160 = vpop.f32.mrb[0].mxu0
    %161 = vdwg.mxu0
    %v162 = vmax.f32 %v156, 0.0
    %v163 = vmax.f32 %v159, 0.0
    %v164 = vpack.c.bf16 %v163, %v162
    %v165 = vld [vmem:[%s5] sm:$0xf]
    %v166 = vld [vmem:[%s5 + $0x4] sm:$0xf]
    %v167 = vld [vmem:[%s6] sm:$0x1]
    %v169 = vlaneseq
    %v170 = vshrl.u32 %v169, 7
    %v171 = vsub.s32 0, %v170
    %v172 = vrot.slane %v167, %v171
    %v176 = vunpack.c.l.b16 %v165
    %v177 = vunpack.c.l.b16 %v166
    %v178 = vpack.c.b16 %v177, %v176
    %v181 = vsel %vm46, %v164, 0
    %183 = vmatprep.subr.bf16.mxu0 0
    %184 = vmatpush1.bf16.msra.mxu0 %v178
    %185 = vmatprep.subr.bf16.mxu0 0
    %186 = vmatpush1.bf16.msra.mxu0 0
    %187 = vmatprep.subr.bf16.mxu0 0
    %188 = vmatpush1.bf16.msra.mxu0 0
    %189 = vmatprep.subr.bf16.mxu0 0
    %190 = vmatpush1.bf16.msra.mxu0 0
    %191 = vmatprep.subr.bf16.mxu0 0
    %192 = vmatpush1.bf16.msra.mxu0 0
    %193 = vmatprep.subr.bf16.mxu0 0
    %194 = vmatpush1.bf16.msra.mxu0 0
    %195 = vmatprep.subr.bf16.mxu0 0
    %196 = vmatpush1.bf16.msra.mxu0 0
    %197 = vmatprep.subr.bf16.mxu0 0
    %198 = vmatpush1.bf16.msra.mxu0 0
    %199 = vmatprep.subr.bf16.mxu0 0
    %200 = vmatpush1.bf16.msra.mxu0 0
    %201 = vmatprep.subr.bf16.mxu0 0
    %202 = vmatpush1.bf16.msra.mxu0 0
    %203 = vmatprep.subr.bf16.mxu0 0
    %204 = vmatpush1.bf16.msra.mxu0 0
    %205 = vmatprep.subr.bf16.mxu0 0
    %206 = vmatpush1.bf16.msra.mxu0 0
    %207 = vmatprep.subr.bf16.mxu0 0
    %208 = vmatpush1.bf16.msra.mxu0 0
    %209 = vmatprep.subr.bf16.mxu0 0
    %210 = vmatpush1.bf16.msra.mxu0 0
    %211 = vmatprep.subr.bf16.mxu0 0
    %212 = vmatpush1.bf16.msra.mxu0 0
    %213 = vmatprep.subr.bf16.mxu0 0
    %214 = vmatpush1.bf16.msra.mxu0 0
    %215 = vmatprep.mubr.bf16.mxu0 0
    %216 = vmatmul.mubr.bf16.gmra.mrb[0].mxu0 %v181
    %v217 = vpop.f32.mrb[0].mxu0
    %v218 = vadd.f32 %v172, %v217
    %v219 = vpop.f32.mrb[0].mxu0
    %v220 = vpop.f32.mrb[0].mxu0
    %v221 = vadd.f32 %v172, %v220
    %v222 = vpop.f32.mrb[0].mxu0
    %223 = vdwg.mxu0
    %224 = vmax.xlane.f32.xlu0 %v218
    %v225 = vpop.xlane.xlu0 %224
    %226 = vmax.xlane.f32.xlu0 %v221
    %v227 = vpop.xlane.xlu0 %226
    %v228 = vsub.f32 %v218, %v225
    %v229 = vsub.f32 %v221, %v227
    %v230 = vmul.f32 %v228, 1.442695
    %v231 = vpow.pop %v230
    %v232 = vmul.f32 %v229, 1.442695
    %v233 = vpow.pop %v232
    %234 = vadd.xlane.f32.xlu0 %v231
    %v235 = vpop.xlane.xlu0 %234
    %236 = vadd.xlane.f32.xlu0 %v233
    %v237 = vpop.xlane.xlu0 %236
    %v238 = vrcp.pop %v235
    %v239 = vmul.f32 %v231, %v238
    %v240 = vrcp.pop %v237
    %v241 = vmul.f32 %v233, %v240
    %v242 = vpack.c.bf16 %v241, %v239
    %v244 = vunpack.c.l.b16 %v242
    %v245 = vunpack.c.h.b16 %v242
    %v246 = vpack.c.b16 %v244, %v244
    %v247 = vpack.c.b16 %v245, %v245
    %250 = vst [vmem:[#allocation2] sm:$0xf] %v246
    %251 = vst [vmem:[#allocation2 + $0x4] sm:$0xf] %v247
    // Predicated region
    $region30: #{tpu_custom_call.1} parent=1 // pred_check
      _
    $region31: #{tpu_custom_call.1} parent=1 // pred_check_branch
      %253 = sbr.rel (0) target = $region33
    $region32: #{tpu_custom_call.1} parent=1 // pred_region
      %s255 = ssub.s32 128, 128
      %256 = vsyncadd [#allocation3], %s255
      %s257 = sshll.u32 [#allocation2], 4
      %s258 = int_to_ptr.vmem [resolvable:$true] %s257
      %263 = dma.vmem_to_hbm [thread:$0]  %s258, 128, %s7, [#allocation3], 64, 64, 4
    $region33: #{tpu_custom_call.1} parent=1 // pred_fallthru
      _
    // Predicated region
    $region34: #{tpu_custom_call.1} parent=1 // pred_check
      _
    $region35: #{tpu_custom_call.1} parent=1 // pred_check_branch
      %265 = sbr.rel (0) target = $region37
    $region36: #{tpu_custom_call.1} parent=1 // pred_region
      %266 = dma.done [#allocation3], 128
    $region37: #{tpu_custom_call.1} parent=1 // pred_fallthru
      _
    %267 = vsyncpa [#allocation3], 1

</llo_original>
